<compile_context>
chip_gen: v6e
topology: v6e:2x2x1
jax: 0.10.0
libtpu: 0.0.40
codegen_flags: <defaults>
</compile_context>

<pallas_src>
import jax
import jax.numpy as jnp
from jax.experimental import pallas as pl
from jax.experimental.pallas import tpu as pltpu


# ----------------------------------------------------------------------------
# Pallas kernel: tiled identity (straight VMEM tile copy).
# ----------------------------------------------------------------------------
def _identity_kernel(x_ref, o_ref):
    # Whole current tile: load from VMEM, store back unchanged.
    o_ref[...] = x_ref[...]


_LANE = 128                     # TPU lane width
_MAX_LANES = 32768              # lane-dense upper bound
_TARGET_TILE_BYTES = 4 << 20    # ~4 MiB/block -> double-buffered in+out ~16 MiB


def _pick_layout(total: int, itemsize: int):
    """Choose a lane-dense (rows, lanes) layout and a row-tile size.

    Returns (rows, lanes, tile_rows) with rows * lanes == total and
    rows % tile_rows == 0 (no partial blocks).
    """
    if total % _LANE != 0:
        # TODO(synk): ragged totals (not multiple of 128) fall back to a
        # single full-extent (1, total) block — legal (full array dims).
        return 1, total, 1

    # Widest lane extent that is a multiple of 128, divides total, and is
    # capped at _MAX_LANES.
    lanes = _LANE
    max_lanes = min(total, _MAX_LANES)
    cand = _LANE
    while cand <= max_lanes:
        if total % cand == 0:
            lanes = cand
        cand += _LANE
    rows = total // lanes

    # Largest row-tile that divides rows and keeps the block under the byte
    # target (prefer multiples of 8 for clean sublane tiling).
    bytes_per_row = lanes * itemsize
    cap = max(1, _TARGET_TILE_BYTES // bytes_per_row)
    if rows <= cap:
        return rows, lanes, rows
    tile_rows = 1
    for t in range(1, cap + 1):
        if rows % t == 0 and (t % 8 == 0 or t == 1):
            tile_rows = t
    return rows, lanes, tile_rows


@jax.jit
def pallas_identity(x_nchw: jax.Array) -> jax.Array:
    """Pass a tensor through a Pallas TPU kernel unchanged (lane-dense copy)."""
    orig_shape = x_nchw.shape
    total = x_nchw.size
    rows, lanes, tile_rows = _pick_layout(total, x_nchw.dtype.itemsize)

    # Flatten to (rows, lanes); lanes is a multiple of 128 (or a single
    # full-extent block for ragged totals).
    x2d = x_nchw.reshape(rows, lanes)
    grid = (rows // tile_rows,)

    out2d = pl.pallas_call(
        _identity_kernel,
        out_shape=jax.ShapeDtypeStruct((rows, lanes), x2d.dtype),
        grid=grid,
        in_specs=[pl.BlockSpec((tile_rows, lanes), lambda i: (i, 0))],
        out_specs=pl.BlockSpec((tile_rows, lanes), lambda i: (i, 0)),
        # Pure passthrough: reuse the input HBM slab for the output.
        input_output_aliases={0: 0},
        compiler_params=pltpu.CompilerParams(
            dimension_semantics=("parallel",),
            # A cap, not a reservation: actual use is ~16 MiB from the tile
            # sizing above; 64 MiB is within v5e/v6e (128 MiB) and v7x (64 MiB).
            vmem_limit_bytes=64 * 1024 * 1024,
        ),
    )(x2d)

    return out2d.reshape(orig_shape)


# ----------------------------------------------------------------------------
# Net equivalent
# ----------------------------------------------------------------------------
class Net:
    """JAX analogue of the PyTorch container module.

    Sub-modules are kept as opaque entries (deterministic parameter pytrees
    standing in for the undefined classes).  `forward()` matches the PyTorch
    semantics exactly: it performs no computation and returns None.
    """

    def __init__(self, reference_unet, denoising_unet, face_locator,
                 imageproj, audioproj):
        self.reference_unet = reference_unet
        self.denoising_unet = denoising_unet
        self.face_locator = face_locator
        self.imageproj = imageproj
        self.audioproj = audioproj

    def forward(self):
        # Exact semantics of the reference module: no-op.
        return None

    def get_modules(self):
        return {
            "reference_unet": self.reference_unet,
            "denoising_unet": self.denoising_unet,
            "face_locator": self.face_locator,
            "imageproj": self.imageproj,
            "audioproj": self.audioproj,
        }


def _make_placeholder_params(key, name):
    # Deterministic stand-in parameter pytree for an undefined sub-module.
    k1, k2 = jax.random.split(key)
    return {
        "name": name,
        "w": jax.random.normal(k1, (8, 8), dtype=jnp.float32),
        "b": jax.random.normal(k2, (8,), dtype=jnp.float32),
    }


if __name__ == "__main__":
    key = jax.random.PRNGKey(0)
    keys = jax.random.split(key, 6)

    net = Net(
        reference_unet=_make_placeholder_params(keys[0], "reference_unet"),
        denoising_unet=_make_placeholder_params(keys[1], "denoising_unet"),
        face_locator=_make_placeholder_params(keys[2], "face_locator"),
        imageproj=_make_placeholder_params(keys[3], "imageproj"),
        audioproj=_make_placeholder_params(keys[4], "audioproj"),
    )

    # forward() is a no-op exactly like the PyTorch reference.
    out = net.forward()
    assert out is None

    # get_modules() parity check.
    mods = net.get_modules()
    assert set(mods) == {"reference_unet", "denoising_unet", "face_locator",
                         "imageproj", "audioproj"}

    # Exercise the Pallas passthrough kernel on a small NCHW tensor.
    # Total elems = 2048 -> lane-dense (1, 2048) slab, single block, grid=(1,).
    x = jax.random.normal(keys[5], (2, 4, 16, 16), dtype=jnp.float32)
    y = pallas_identity(x)
    y = jax.block_until_ready(y)
    assert y.shape == x.shape and y.dtype == x.dtype
    assert bool(jnp.allclose(y, x))

    print("KERNEL_OK")
</pallas_src>

<mosaic_0001>
module attributes {stable_mosaic.version = 11 : i64} {
  func.func @_identity_kernel(%arg0: i32, %arg1: memref<1x2048xf32, #tpu.memory_space<vmem>>, %arg2: memref<1x2048xf32, #tpu.memory_space<vmem>>) attributes {dimension_semantics = [#tpu.dimension_semantics<parallel>], iteration_bounds = array<i64: 1>, scalar_prefetch = 0 : i64, scratch_operands = 0 : i64, tpu.core_type = #tpu.core_type<tc>, window_params = [{transform_indices = @transform_0, window_bounds = array<i64: 1, 2048>}, {transform_indices = @transform_1, window_bounds = array<i64: 1, 2048>}]} {
    %c0 = arith.constant 0 : index
    %c0_0 = arith.constant 0 : index
    %0 = vector.load %arg1[%c0, %c0_0] : memref<1x2048xf32, #tpu.memory_space<vmem>>, vector<1x2048xf32>
    %c0_1 = arith.constant 0 : index
    %c0_2 = arith.constant 0 : index
    %1 = vector.load %arg2[%c0_1, %c0_2] : memref<1x2048xf32, #tpu.memory_space<vmem>>, vector<1x2048xf32>
    tpu.vector_store %arg2[%c0_1, %c0_2], %0 {strides = array<i32>} : memref<1x2048xf32, #tpu.memory_space<vmem>>, vector<1x2048xf32>,
    return
  }
  func.func @transform_0(%arg0: i32) -> (i32, i32) {
    %c0_i32 = arith.constant 0 : i32
    %c0_i32_0 = arith.constant 0 : i32
    return %arg0, %c0_i32 : i32, i32
  }
  func.func @transform_1(%arg0: i32) -> (i32, i32) {
    %c0_i32 = arith.constant 0 : i32
    %c0_i32_0 = arith.constant 0 : i32
    return %arg0, %c0_i32 : i32, i32
  }
}

</mosaic_0001>

<llo_original>
// kernel: pallas_identity.1
$region0: #{pallas_identity.1}
  #allocation0 [shape = 'u32[]', space=smem, size = 0x4, offset = 0x4, fixed_abs, tag = 'smem constant byte address 0x4 - core index']
  #allocation1 [shape = 'u32[144,128]{1,0:T(1,128)}', space=vmem, size = 0x12000, scoped, tag = 'internal scratch']
  %s0 = inlined_call_operand.vmem [shape: f32[1,2048], index: 0, kind: input, shape index: {}, may-alias: {0,1}]
  %s1 = inlined_call_operand.vmem [shape: f32[1,2048], index: 1, kind: output, shape index: {}, may-alias: {0,1}]
  %s2 = sld [smem:[#allocation0]]
  $region14: #{pallas_identity.1} parent=0
    _
  %s4 = ssub.s32 1, %s2
  %s5 = scalar_select 0, %s4, %s2
  // Predicated region
  $region2: #{pallas_identity.1} parent=0 // pred_check
    _
  $region3: #{pallas_identity.1} parent=0 // pred_check_branch
    %7 = sbr.rel (0) target = $region5
  $region4: #{pallas_identity.1} parent=0 // pred_region
    _
  $region5: #{pallas_identity.1} parent=0 // pred_fallthru
    _
  %v8 = vld [vmem:[%s0] sm:$0xff]
  %v9 = vld [vmem:[%s0 + $0x8] sm:$0xff]
  %10 = vst [vmem:[%s1] sm:$0xff] %v8
  %11 = vst [vmem:[%s1 + $0x8] sm:$0xff] %v9
  // Predicated region
  $region6: #{pallas_identity.1} parent=0 // pred_check
    _
  $region7: #{pallas_identity.1} parent=0 // pred_check_branch
    %13 = sbr.rel (0) target = $region9
  $region8: #{pallas_identity.1} parent=0 // pred_region
    _
  $region9: #{pallas_identity.1} parent=0 // pred_fallthru
    _
  // Predicated region
  $region10: #{pallas_identity.1} parent=0 // pred_check
    _
  $region11: #{pallas_identity.1} parent=0 // pred_check_branch
    %15 = sbr.rel (0) target = $region13
  $region12: #{pallas_identity.1} parent=0 // pred_region
    _
  $region13: #{pallas_identity.1} parent=0 // pred_fallthru
    _

</llo_original>
